<compile_context>
chip_gen: v6e
topology: v6e:2x2x1
jax: 0.10.0
libtpu: 0.0.40
codegen_flags: <defaults>
</compile_context>

<pallas_src>
import jax
import jax.numpy as jnp
from jax.experimental import pallas as pl
from jax.experimental.pallas import tpu as pltpu

EPS = 1e-05
C_IN = 104
C_OUT = 624


def bn_add_conv_kernel(x_ref, r_ref, gamma_ref, beta_ref, w_ref, o_ref):
    # x_ref, r_ref : [C_IN, M]  f32   (NCHW with N=1, spatial flattened)
    # gamma_ref    : [C_IN, 1]  f32
    # beta_ref     : [C_IN, 1]  f32
    # w_ref        : [C_OUT, C_IN] bf16 (torch conv weight, 1x1 squeezed, un-transposed)
    # o_ref        : [C_OUT, M] f32
    x = x_ref[...]                                   # f32 [C, M]
    m = x.shape[1]
    inv_m = jnp.float32(1.0 / m)

    # Training-mode BatchNorm2d batch statistics in ONE pass over the slab:
    #   mean  = E[x],  var = E[x^2] - E[x]^2   (biased variance, matches torch training)
    # Both reductions run along the lane axis (natural XLU reduce in this layout).
    s1 = jnp.sum(x, axis=1, keepdims=True)                           # [C, 1]
    s2 = jnp.sum(x * x, axis=1, keepdims=True)                       # [C, 1]
    mean = s1 * inv_m
    var = jnp.maximum(s2 * inv_m - mean * mean, 0.0)                 # clamp fp round-off

    # Fold BN affine into a single scale/shift (one fused multiply-add per element).
    scale = gamma_ref[...] * jax.lax.rsqrt(var + EPS)                # [C, 1]  (EUP rsqrt)
    shift = beta_ref[...] - mean * scale                             # [C, 1]

    # BN + residual add; elementwise math kept in f32 (v5e VPU has no bf16 path).
    y = x * scale + shift + r_ref[...]

    # 1x1 conv (no bias) == W[Cout,Cin] @ Y[Cin,M]; bf16 operands, f32 accumulate (MXU).
    o_ref[...] = jnp.dot(
        w_ref[...], y.astype(jnp.bfloat16),
        preferred_element_type=jnp.float32).astype(o_ref.dtype)


def bn_add_conv(x84, x77, gamma, beta, w):
    """x84, x77: [N, C_IN, H, W] (NCHW). w: [C_OUT, C_IN] (torch 1x1 weight squeezed).
    Returns [N, C_OUT, H, W] float32."""
    n, c, h, wdim = x84.shape
    assert c == C_IN
    m = n * h * wdim

    if n == 1:
        # Pure reshapes — no data movement, no extra XLA transpose kernels.
        x_2d = x84.reshape(c, m)
        r_2d = x77.reshape(c, m)
    else:
        # General-N fallback (module spec is N=1): one transpose to channels-major.
        x_2d = jnp.transpose(x84, (1, 0, 2, 3)).reshape(c, m)
        r_2d = jnp.transpose(x77, (1, 0, 2, 3)).reshape(c, m)

    gamma_2d = gamma.reshape(c, 1).astype(jnp.float32)
    beta_2d = beta.reshape(c, 1).astype(jnp.float32)
    w_bf16 = w.astype(jnp.bfloat16)   # one-time cast: native bf16 MXU path

    flops = 2 * m * C_IN * C_OUT
    bytes_accessed = (4 * (2 * m * C_IN)        # x84 + x77
                      + 4 * (2 * C_IN)          # gamma + beta
                      + 2 * C_IN * C_OUT        # bf16 weight
                      + 4 * m * C_OUT)          # f32 output
    cost = pl.CostEstimate(flops=flops, transcendentals=C_IN,
                           bytes_accessed=bytes_accessed)

    out_2d = pl.pallas_call(
        bn_add_conv_kernel,
        out_shape=jax.ShapeDtypeStruct((C_OUT, m), jnp.float32),
        in_specs=[
            pl.BlockSpec(memory_space=pltpu.MemorySpace.VMEM),  # x84 slab
            pl.BlockSpec(memory_space=pltpu.MemorySpace.VMEM),  # x77 slab
            pl.BlockSpec(memory_space=pltpu.MemorySpace.VMEM),  # gamma
            pl.BlockSpec(memory_space=pltpu.MemorySpace.VMEM),  # beta
            pl.BlockSpec(memory_space=pltpu.MemorySpace.VMEM),  # weight (bf16)
        ],
        out_specs=pl.BlockSpec(memory_space=pltpu.MemorySpace.VMEM),
        cost_estimate=cost,
    )(x_2d, r_2d, gamma_2d, beta_2d, w_bf16)

    # TODO(synk): training-mode BatchNorm2d also updates running_mean/running_var with
    # momentum; that buffer side effect is not emitted here.
    if n == 1:
        return out_2d.reshape(1, C_OUT, h, wdim)          # pure reshape, no transpose
    return jnp.transpose(out_2d.reshape(C_OUT, n, h, wdim), (1, 0, 2, 3))


if __name__ == "__main__":
    key = jax.random.PRNGKey(0)
    k1, k2, k3, k4, k5 = jax.random.split(key, 5)

    # Module's native shapes: [1, 104, 14, 14]
    x84 = jax.random.normal(k1, (1, C_IN, 14, 14), dtype=jnp.float32)
    x77 = jax.random.normal(k2, (1, C_IN, 14, 14), dtype=jnp.float32)

    # Deterministic synthetic parameters.
    gamma = 1.0 + 0.1 * jax.random.normal(k3, (C_IN,), dtype=jnp.float32)
    beta = 0.1 * jax.random.normal(k4, (C_IN,), dtype=jnp.float32)
    # Conv2d(104, 624, 1x1) weight in torch is [624, 104, 1, 1]; squeezed to [C_OUT, C_IN].
    w = 0.05 * jax.random.normal(k5, (C_OUT, C_IN), dtype=jnp.float32)

    fn = jax.jit(bn_add_conv)   # single fused dispatch: reshapes fold into the custom call
    out = fn(x84, x77, gamma, beta, w)
    jax.block_until_ready(out)
    assert out.shape == (1, C_OUT, 14, 14), out.shape

    # Pure-JAX reference (training-mode BN with batch stats), f32 throughout.
    xr = x84.reshape(C_IN, -1)
    mean = xr.mean(axis=1, keepdims=True)
    var = ((xr - mean) ** 2).mean(axis=1, keepdims=True)
    y_ref = (xr - mean) * jax.lax.rsqrt(var + EPS) * gamma.reshape(-1, 1) + beta.reshape(-1, 1)
    y_ref = y_ref + x77.reshape(C_IN, -1)
    ref = jnp.dot(w, y_ref, precision=jax.lax.Precision.HIGHEST).reshape(1, C_OUT, 14, 14)
    max_err = float(jnp.max(jnp.abs(out - ref)))
    assert max_err < 1e-1, max_err  # bf16 matmul operands, f32 accumulation

    print("KERNEL_OK")
</pallas_src>

<mosaic_0001>
module attributes {stable_mosaic.version = 11 : i64} {
  func.func @bn_add_conv_kernel(%arg0: memref<104x196xf32, #tpu.memory_space<vmem>>, %arg1: memref<104x196xf32, #tpu.memory_space<vmem>>, %arg2: memref<104x1xf32, #tpu.memory_space<vmem>>, %arg3: memref<104x1xf32, #tpu.memory_space<vmem>>, %arg4: memref<624x104xbf16, #tpu.memory_space<vmem>>, %arg5: memref<624x196xf32, #tpu.memory_space<vmem>>) attributes {dimension_semantics = [], scalar_prefetch = 0 : i64, scratch_operands = 0 : i64, tpu.core_type = #tpu.core_type<tc>} {
    %c0 = arith.constant 0 : index
    %c0_0 = arith.constant 0 : index
    %0 = vector.load %arg0[%c0, %c0_0] : memref<104x196xf32, #tpu.memory_space<vmem>>, vector<104x196xf32>
    %cst = arith.constant dense<0.000000e+00> : vector<104xf32>
    %1 = vector.multi_reduction <add>, %0, %cst [1] : vector<104x196xf32> to vector<104xf32>
    %2 = vector.shape_cast %1 : vector<104xf32> to vector<104x1xf32>
    %3 = arith.mulf %0, %0 : vector<104x196xf32>
    %cst_1 = arith.constant dense<0.000000e+00> : vector<104xf32>
    %4 = vector.multi_reduction <add>, %3, %cst_1 [1] : vector<104x196xf32> to vector<104xf32>
    %5 = vector.shape_cast %4 : vector<104xf32> to vector<104x1xf32>
    %cst_2 = arith.constant 0.00510204071 : f32
    %6 = vector.broadcast %cst_2 : f32 to vector<104x1xf32>
    %7 = arith.mulf %2, %6 : vector<104x1xf32>
    %cst_3 = arith.constant 0.00510204071 : f32
    %8 = vector.broadcast %cst_3 : f32 to vector<104x1xf32>
    %9 = arith.mulf %5, %8 : vector<104x1xf32>
    %10 = arith.mulf %7, %7 : vector<104x1xf32>
    %11 = arith.subf %9, %10 : vector<104x1xf32>
    %cst_4 = arith.constant 0.000000e+00 : f32
    %12 = vector.broadcast %cst_4 : f32 to vector<104x1xf32>
    %13 = arith.maximumf %11, %12 : vector<104x1xf32>
    %c0_5 = arith.constant 0 : index
    %c0_6 = arith.constant 0 : index
    %14 = vector.load %arg2[%c0_5, %c0_6] : memref<104x1xf32, #tpu.memory_space<vmem>>, vector<104x1xf32>
    %cst_7 = arith.constant 9.99999974E-6 : f32
    %15 = vector.broadcast %cst_7 : f32 to vector<104x1xf32>
    %16 = arith.addf %13, %15 : vector<104x1xf32>
    %17 = math.rsqrt %16 : vector<104x1xf32>
    %18 = arith.mulf %14, %17 : vector<104x1xf32>
    %c0_8 = arith.constant 0 : index
    %c0_9 = arith.constant 0 : index
    %19 = vector.load %arg3[%c0_8, %c0_9] : memref<104x1xf32, #tpu.memory_space<vmem>>, vector<104x1xf32>
    %20 = arith.mulf %7, %18 : vector<104x1xf32>
    %21 = arith.subf %19, %20 : vector<104x1xf32>
    %22 = vector.broadcast %18 : vector<104x1xf32> to vector<104x196xf32>
    %23 = arith.mulf %0, %22 : vector<104x196xf32>
    %24 = vector.broadcast %21 : vector<104x1xf32> to vector<104x196xf32>
    %25 = arith.addf %23, %24 : vector<104x196xf32>
    %c0_10 = arith.constant 0 : index
    %c0_11 = arith.constant 0 : index
    %26 = vector.load %arg1[%c0_10, %c0_11] : memref<104x196xf32, #tpu.memory_space<vmem>>, vector<104x196xf32>
    %27 = arith.addf %25, %26 : vector<104x196xf32>
    %c0_12 = arith.constant 0 : index
    %c0_13 = arith.constant 0 : index
    %28 = vector.load %arg4[%c0_12, %c0_13] : memref<624x104xbf16, #tpu.memory_space<vmem>>, vector<624x104xbf16>
    %29 = arith.truncf %27 : vector<104x196xf32> to vector<104x196xbf16>
    %cst_14 = arith.constant dense<0.000000e+00> : vector<624x196xf32>
    %30 = tpu.matmul %28, %29, %cst_14 {dimension_numbers = #tpu.dot_dimension_numbers<[1], [0], [0], [1], [0, 0, 1, 1], [], []>} : vector<624x104xbf16>, vector<104x196xbf16>, vector<624x196xf32> -> vector<624x196xf32>
    %c0_15 = arith.constant 0 : index
    %c0_16 = arith.constant 0 : index
    %31 = vector.load %arg5[%c0_15, %c0_16] : memref<624x196xf32, #tpu.memory_space<vmem>>, vector<624x196xf32>
    tpu.vector_store %arg5[%c0_15, %c0_16], %30 {strides = array<i32>} : memref<624x196xf32, #tpu.memory_space<vmem>>, vector<624x196xf32>,
    return
  }
}

</mosaic_0001>

<llo_original>
// kernel: bn_add_conv.1
$region0: #{bn_add_conv.1}
  #allocation0 [shape = 'u32[]', space=smem, size = 0x4, offset = 0x4, fixed_abs, tag = 'smem constant byte address 0x4 - core index']
  #allocation1 [shape = 'u32[144,128]{1,0:T(1,128)}', space=vmem, size = 0x12000, scoped, tag = 'internal scratch']
  %s0 = inlined_call_operand.vmem [shape: f32[104,196], index: 0, kind: input, shape index: {}]
  %s1 = inlined_call_operand.vmem [shape: f32[104,196], index: 1, kind: input, shape index: {}]
  %s2 = inlined_call_operand.vmem [shape: f32[104,1], index: 2, kind: input, shape index: {}]
  %s3 = inlined_call_operand.vmem [shape: f32[104,1], index: 3, kind: input, shape index: {}]
  %s4 = inlined_call_operand.vmem [shape: bf16[624,104], index: 4, kind: input, shape index: {}]
  %s5 = inlined_call_operand.vmem [shape: f32[624,196], index: 5, kind: output, shape index: {}]
  %s6 = sld [smem:[#allocation0]]
  $region30: #{bn_add_conv.1} parent=0
    _
  %s8 = ssub.s32 1, %s6
  %s9 = scalar_select 0, %s8, %s6
  // Predicated region
  $region2: #{bn_add_conv.1} parent=0 // pred_check
    _
  $region3: #{bn_add_conv.1} parent=0 // pred_check_branch
    %11 = sbr.rel (0) target = $region5
  $region4: #{bn_add_conv.1} parent=0 // pred_region
    _
  $region5: #{bn_add_conv.1} parent=0 // pred_fallthru
    _
  // Predicated region
  $region6: #{bn_add_conv.1} parent=0 // pred_check
    _
  $region7: #{bn_add_conv.1} parent=0 // pred_check_branch
    %13 = sbr.rel (0) target = $region9
  $region8: #{bn_add_conv.1} parent=0 // pred_region
    _
  $region9: #{bn_add_conv.1} parent=0 // pred_fallthru
    _
  // Predicated region
  $region10: #{bn_add_conv.1} parent=0 // pred_check
    _
  $region11: #{bn_add_conv.1} parent=0 // pred_check_branch
    %15 = sbr.rel (0) target = $region13
  $region12: #{bn_add_conv.1} parent=0 // pred_region
    _
  $region13: #{bn_add_conv.1} parent=0 // pred_fallthru
    _
  // Predicated region
  $region14: #{bn_add_conv.1} parent=0 // pred_check
    _
  $region15: #{bn_add_conv.1} parent=0 // pred_check_branch
    %17 = sbr.rel (0) target = $region17
  $region16: #{bn_add_conv.1} parent=0 // pred_region
    _
  $region17: #{bn_add_conv.1} parent=0 // pred_fallthru
    _
  // Predicated region
  $region18: #{bn_add_conv.1} parent=0 // pred_check
    _
  $region19: #{bn_add_conv.1} parent=0 // pred_check_branch
    %19 = sbr.rel (0) target = $region21
  $region20: #{bn_add_conv.1} parent=0 // pred_region
    _
  $region21: #{bn_add_conv.1} parent=0 // pred_fallthru
    _
  %v21 = vld [vmem:[%s0] sm:$0xff]
  %v22 = vld [vmem:[%s0 + $0x8] sm:$0xff]
  %v23 = vld [vmem:[%s0 + $0x10] sm:$0xff]
  %v24 = vld [vmem:[%s0 + $0x18] sm:$0xff]
  %v25 = vld [vmem:[%s0 + $0x20] sm:$0xff]
  %v26 = vld [vmem:[%s0 + $0x28] sm:$0xff]
  %v27 = vld [vmem:[%s0 + $0x30] sm:$0xff]
  %v28 = vld [vmem:[%s0 + $0x38] sm:$0xff]
  %v29 = vld [vmem:[%s0 + $0x40] sm:$0xff]
  %v30 = vld [vmem:[%s0 + $0x48] sm:$0xff]
  %v31 = vld [vmem:[%s0 + $0x50] sm:$0xff]
  %v32 = vld [vmem:[%s0 + $0x58] sm:$0xff]
  %v33 = vld [vmem:[%s0 + $0x60] sm:$0xff]
  %v34 = vld [vmem:[%s0 + $0x68] sm:$0xff]
  %v35 = vld [vmem:[%s0 + $0x70] sm:$0xff]
  %v36 = vld [vmem:[%s0 + $0x78] sm:$0xff]
  %v37 = vld [vmem:[%s0 + $0x80] sm:$0xff]
  %v38 = vld [vmem:[%s0 + $0x88] sm:$0xff]
  %v39 = vld [vmem:[%s0 + $0x90] sm:$0xff]
  %v40 = vld [vmem:[%s0 + $0x98] sm:$0xff]
  %v41 = vld [vmem:[%s0 + $0xa0] sm:$0xff]
  %v42 = vld [vmem:[%s0 + $0xa8] sm:$0xff]
  %v43 = vld [vmem:[%s0 + $0xb0] sm:$0xff]
  %v44 = vld [vmem:[%s0 + $0xb8] sm:$0xff]
  %v45 = vld [vmem:[%s0 + $0xc0] sm:$0xff]
  %v46 = vld [vmem:[%s0 + $0xc8] sm:$0xff]
  %vm47 = vcmask 556032
  %v48 = vsel %vm47, %v22, 0.0
  %v49 = vadd.f32 %v21, %v48
  %50 = vadd.xlane.f32.xlu0 %v49
  %v51 = vpop.xlane.xlu0 %50
  %v52 = vsel %vm47, %v24, 0.0
  %v53 = vadd.f32 %v23, %v52
  %54 = vadd.xlane.f32.xlu0 %v53
  %v55 = vpop.xlane.xlu0 %54
  %v56 = vsel %vm47, %v26, 0.0
  %v57 = vadd.f32 %v25, %v56
  %58 = vadd.xlane.f32.xlu0 %v57
  %v59 = vpop.xlane.xlu0 %58
  %v60 = vsel %vm47, %v28, 0.0
  %v61 = vadd.f32 %v27, %v60
  %62 = vadd.xlane.f32.xlu0 %v61
  %v63 = vpop.xlane.xlu0 %62
  %v64 = vsel %vm47, %v30, 0.0
  %v65 = vadd.f32 %v29, %v64
  %66 = vadd.xlane.f32.xlu0 %v65
  %v67 = vpop.xlane.xlu0 %66
  %v68 = vsel %vm47, %v32, 0.0
  %v69 = vadd.f32 %v31, %v68
  %70 = vadd.xlane.f32.xlu0 %v69
  %v71 = vpop.xlane.xlu0 %70
  %v72 = vsel %vm47, %v34, 0.0
  %v73 = vadd.f32 %v33, %v72
  %74 = vadd.xlane.f32.xlu0 %v73
  %v75 = vpop.xlane.xlu0 %74
  %v76 = vsel %vm47, %v36, 0.0
  %v77 = vadd.f32 %v35, %v76
  %78 = vadd.xlane.f32.xlu0 %v77
  %v79 = vpop.xlane.xlu0 %78
  %v80 = vsel %vm47, %v38, 0.0
  %v81 = vadd.f32 %v37, %v80
  %82 = vadd.xlane.f32.xlu0 %v81
  %v83 = vpop.xlane.xlu0 %82
  %v84 = vsel %vm47, %v40, 0.0
  %v85 = vadd.f32 %v39, %v84
  %86 = vadd.xlane.f32.xlu0 %v85
  %v87 = vpop.xlane.xlu0 %86
  %v88 = vsel %vm47, %v42, 0.0
  %v89 = vadd.f32 %v41, %v88
  %90 = vadd.xlane.f32.xlu0 %v89
  %v91 = vpop.xlane.xlu0 %90
  %v92 = vsel %vm47, %v44, 0.0
  %v93 = vadd.f32 %v43, %v92
  %94 = vadd.xlane.f32.xlu0 %v93
  %v95 = vpop.xlane.xlu0 %94
  %v96 = vsel %vm47, %v46, 0.0
  %v97 = vadd.f32 %v45, %v96
  %98 = vadd.xlane.f32.xlu0 %v97
  %v99 = vpop.xlane.xlu0 %98
  %v100 = vmul.f32 %v21, %v21
  %v101 = vmul.f32 %v22, %v22
  %v102 = vmul.f32 %v23, %v23
  %v103 = vmul.f32 %v24, %v24
  %v104 = vmul.f32 %v25, %v25
  %v105 = vmul.f32 %v26, %v26
  %v106 = vmul.f32 %v27, %v27
  %v107 = vmul.f32 %v28, %v28
  %v108 = vmul.f32 %v29, %v29
  %v109 = vmul.f32 %v30, %v30
  %v110 = vmul.f32 %v31, %v31
  %v111 = vmul.f32 %v32, %v32
  %v112 = vmul.f32 %v33, %v33
  %v113 = vmul.f32 %v34, %v34
  %v114 = vmul.f32 %v35, %v35
  %v115 = vmul.f32 %v36, %v36
  %v116 = vmul.f32 %v37, %v37
  %v117 = vmul.f32 %v38, %v38
  %v118 = vmul.f32 %v39, %v39
  %v119 = vmul.f32 %v40, %v40
  %v120 = vmul.f32 %v41, %v41
  %v121 = vmul.f32 %v42, %v42
  %v122 = vmul.f32 %v43, %v43
  %v123 = vmul.f32 %v44, %v44
  %v124 = vmul.f32 %v45, %v45
  %v125 = vmul.f32 %v46, %v46
  %v126 = vsel %vm47, %v101, 0.0
  %v127 = vadd.f32 %v100, %v126
  %128 = vadd.xlane.f32.xlu0 %v127
  %v129 = vpop.xlane.xlu0 %128
  %v130 = vsel %vm47, %v103, 0.0
  %v131 = vadd.f32 %v102, %v130
  %132 = vadd.xlane.f32.xlu0 %v131
  %v133 = vpop.xlane.xlu0 %132
  %v134 = vsel %vm47, %v105, 0.0
  %v135 = vadd.f32 %v104, %v134
  %136 = vadd.xlane.f32.xlu0 %v135
  %v137 = vpop.xlane.xlu0 %136
  %v138 = vsel %vm47, %v107, 0.0
  %v139 = vadd.f32 %v106, %v138
  %140 = vadd.xlane.f32.xlu0 %v139
  %v141 = vpop.xlane.xlu0 %140
  %v142 = vsel %vm47, %v109, 0.0
  %v143 = vadd.f32 %v108, %v142
  %144 = vadd.xlane.f32.xlu0 %v143
  %v145 = vpop.xlane.xlu0 %144
  %v146 = vsel %vm47, %v111, 0.0
  %v147 = vadd.f32 %v110, %v146
  %148 = vadd.xlane.f32.xlu0 %v147
  %v149 = vpop.xlane.xlu0 %148
  %v150 = vsel %vm47, %v113, 0.0
  %v151 = vadd.f32 %v112, %v150
  %152 = vadd.xlane.f32.xlu0 %v151
  %v153 = vpop.xlane.xlu0 %152
  %v154 = vsel %vm47, %v115, 0.0
  %v155 = vadd.f32 %v114, %v154
  %156 = vadd.xlane.f32.xlu0 %v155
  %v157 = vpop.xlane.xlu0 %156
  %v158 = vsel %vm47, %v117, 0.0
  %v159 = vadd.f32 %v116, %v158
  %160 = vadd.xlane.f32.xlu0 %v159
  %v161 = vpop.xlane.xlu0 %160
  %v162 = vsel %vm47, %v119, 0.0
  %v163 = vadd.f32 %v118, %v162
  %164 = vadd.xlane.f32.xlu0 %v163
  %v165 = vpop.xlane.xlu0 %164
  %v166 = vsel %vm47, %v121, 0.0
  %v167 = vadd.f32 %v120, %v166
  %168 = vadd.xlane.f32.xlu0 %v167
  %v169 = vpop.xlane.xlu0 %168
  %v170 = vsel %vm47, %v123, 0.0
  %v171 = vadd.f32 %v122, %v170
  %172 = vadd.xlane.f32.xlu0 %v171
  %v173 = vpop.xlane.xlu0 %172
  %v174 = vsel %vm47, %v125, 0.0
  %v175 = vadd.f32 %v124, %v174
  %176 = vadd.xlane.f32.xlu0 %v175
  %v177 = vpop.xlane.xlu0 %176
  %v178 = vmul.f32 %v51, 0.0051020407
  %v179 = vmul.f32 %v55, 0.0051020407
  %v180 = vmul.f32 %v59, 0.0051020407
  %v181 = vmul.f32 %v63, 0.0051020407
  %v182 = vmul.f32 %v67, 0.0051020407
  %v183 = vmul.f32 %v71, 0.0051020407
  %v184 = vmul.f32 %v75, 0.0051020407
  %v185 = vmul.f32 %v79, 0.0051020407
  %v186 = vmul.f32 %v83, 0.0051020407
  %v187 = vmul.f32 %v87, 0.0051020407
  %v188 = vmul.f32 %v91, 0.0051020407
  %v189 = vmul.f32 %v95, 0.0051020407
  %v190 = vmul.f32 %v99, 0.0051020407
  %v191 = vmul.f32 %v129, 0.0051020407
  %v192 = vmul.f32 %v133, 0.0051020407
  %v193 = vmul.f32 %v137, 0.0051020407
  %v194 = vmul.f32 %v141, 0.0051020407
  %v195 = vmul.f32 %v145, 0.0051020407
  %v196 = vmul.f32 %v149, 0.0051020407
  %v197 = vmul.f32 %v153, 0.0051020407
  %v198 = vmul.f32 %v157, 0.0051020407
  %v199 = vmul.f32 %v161, 0.0051020407
  %v200 = vmul.f32 %v165, 0.0051020407
  %v201 = vmul.f32 %v169, 0.0051020407
  %v202 = vmul.f32 %v173, 0.0051020407
  %v203 = vmul.f32 %v177, 0.0051020407
  %v204 = vmul.f32 %v178, %v178
  %v205 = vmul.f32 %v179, %v179
  %v206 = vmul.f32 %v180, %v180
  %v207 = vmul.f32 %v181, %v181
  %v208 = vmul.f32 %v182, %v182
  %v209 = vmul.f32 %v183, %v183
  %v210 = vmul.f32 %v184, %v184
  %v211 = vmul.f32 %v185, %v185
  %v212 = vmul.f32 %v186, %v186
  %v213 = vmul.f32 %v187, %v187
  %v214 = vmul.f32 %v188, %v188
  %v215 = vmul.f32 %v189, %v189
  %v216 = vmul.f32 %v190, %v190
  %v217 = vsub.f32 %v191, %v204
  %v218 = vsub.f32 %v192, %v205
  %v219 = vsub.f32 %v193, %v206
  %v220 = vsub.f32 %v194, %v207
  %v221 = vsub.f32 %v195, %v208
  %v222 = vsub.f32 %v196, %v209
  %v223 = vsub.f32 %v197, %v210
  %v224 = vsub.f32 %v198, %v211
  %v225 = vsub.f32 %v199, %v212
  %v226 = vsub.f32 %v200, %v213
  %v227 = vsub.f32 %v201, %v214
  %v228 = vsub.f32 %v202, %v215
  %v229 = vsub.f32 %v203, %v216
  %v230 = vmax.f32 %v217, 0.0
  %v231 = vmax.f32 %v218, 0.0
  %v232 = vmax.f32 %v219, 0.0
  %v233 = vmax.f32 %v220, 0.0
  %v234 = vmax.f32 %v221, 0.0
  %v235 = vmax.f32 %v222, 0.0
  %v236 = vmax.f32 %v223, 0.0
  %v237 = vmax.f32 %v224, 0.0
  %v238 = vmax.f32 %v225, 0.0
  %v239 = vmax.f32 %v226, 0.0
  %v240 = vmax.f32 %v227, 0.0
  %v241 = vmax.f32 %v228, 0.0
  %v242 = vmax.f32 %v229, 0.0
  %v243 = vld [vmem:[%s2] sm:$0xff]
  %v244 = vld [vmem:[%s2 + $0x8] sm:$0xff]
  %v245 = vld [vmem:[%s2 + $0x10] sm:$0xff]
  %v246 = vld [vmem:[%s2 + $0x18] sm:$0xff]
  %v247 = vld [vmem:[%s2 + $0x20] sm:$0xff]
  %v248 = vld [vmem:[%s2 + $0x28] sm:$0xff]
  %v249 = vld [vmem:[%s2 + $0x30] sm:$0xff]
  %v250 = vld [vmem:[%s2 + $0x38] sm:$0xff]
  %v251 = vld [vmem:[%s2 + $0x40] sm:$0xff]
  %v252 = vld [vmem:[%s2 + $0x48] sm:$0xff]
  %v253 = vld [vmem:[%s2 + $0x50] sm:$0xff]
  %v254 = vld [vmem:[%s2 + $0x58] sm:$0xff]
  %v255 = vld [vmem:[%s2 + $0x60] sm:$0xff]
  %v256 = vadd.f32 %v230, 1e-05
  %v257 = vadd.f32 %v231, 1e-05
  %v258 = vadd.f32 %v232, 1e-05
  %v259 = vadd.f32 %v233, 1e-05
  %v260 = vadd.f32 %v234, 1e-05
  %v261 = vadd.f32 %v235, 1e-05
  %v262 = vadd.f32 %v236, 1e-05
  %v263 = vadd.f32 %v237, 1e-05
  %v264 = vadd.f32 %v238, 1e-05
  %v265 = vadd.f32 %v239, 1e-05
  %v266 = vadd.f32 %v240, 1e-05
  %v267 = vadd.f32 %v241, 1e-05
  %v268 = vadd.f32 %v242, 1e-05
  %v269 = vrsqrt.pop %v256
  %v270 = vrsqrt.pop %v257
  %v271 = vrsqrt.pop %v258
  %v272 = vrsqrt.pop %v259
  %v273 = vrsqrt.pop %v260
  %v274 = vrsqrt.pop %v261
  %v275 = vrsqrt.pop %v262
  %v276 = vrsqrt.pop %v263
  %v277 = vrsqrt.pop %v264
  %v278 = vrsqrt.pop %v265
  %v279 = vrsqrt.pop %v266
  %v280 = vrsqrt.pop %v267
  %v281 = vrsqrt.pop %v268
  %v282 = vmul.f32 %v243, %v269
  %v283 = vmul.f32 %v244, %v270
  %v284 = vmul.f32 %v245, %v271
  %v285 = vmul.f32 %v246, %v272
  %v286 = vmul.f32 %v247, %v273
  %v287 = vmul.f32 %v248, %v274
  %v288 = vmul.f32 %v249, %v275
  %v289 = vmul.f32 %v250, %v276
  %v290 = vmul.f32 %v251, %v277
  %v291 = vmul.f32 %v252, %v278
  %v292 = vmul.f32 %v253, %v279
  %v293 = vmul.f32 %v254, %v280
  %v294 = vmul.f32 %v255, %v281
  %v295 = vld [vmem:[%s3] sm:$0xff]
  %v296 = vld [vmem:[%s3 + $0x8] sm:$0xff]
  %v297 = vld [vmem:[%s3 + $0x10] sm:$0xff]
  %v298 = vld [vmem:[%s3 + $0x18] sm:$0xff]
  %v299 = vld [vmem:[%s3 + $0x20] sm:$0xff]
  %v300 = vld [vmem:[%s3 + $0x28] sm:$0xff]
  %v301 = vld [vmem:[%s3 + $0x30] sm:$0xff]
  %v302 = vld [vmem:[%s3 + $0x38] sm:$0xff]
  %v303 = vld [vmem:[%s3 + $0x40] sm:$0xff]
  %v304 = vld [vmem:[%s3 + $0x48] sm:$0xff]
  %v305 = vld [vmem:[%s3 + $0x50] sm:$0xff]
  %v306 = vld [vmem:[%s3 + $0x58] sm:$0xff]
  %v307 = vld [vmem:[%s3 + $0x60] sm:$0xff]
  %v308 = vmul.f32 %v178, %v282
  %v309 = vmul.f32 %v179, %v283
  %v310 = vmul.f32 %v180, %v284
  %v311 = vmul.f32 %v181, %v285
  %v312 = vmul.f32 %v182, %v286
  %v313 = vmul.f32 %v183, %v287
  %v314 = vmul.f32 %v184, %v288
  %v315 = vmul.f32 %v185, %v289
  %v316 = vmul.f32 %v186, %v290
  %v317 = vmul.f32 %v187, %v291
  %v318 = vmul.f32 %v188, %v292
  %v319 = vmul.f32 %v189, %v293
  %v320 = vmul.f32 %v190, %v294
  %v321 = vsub.f32 %v295, %v308
  %v322 = vsub.f32 %v296, %v309
  %v323 = vsub.f32 %v297, %v310
  %v324 = vsub.f32 %v298, %v311
  %v325 = vsub.f32 %v299, %v312
  %v326 = vsub.f32 %v300, %v313
  %v327 = vsub.f32 %v301, %v314
  %v328 = vsub.f32 %v302, %v315
  %v329 = vsub.f32 %v303, %v316
  %v330 = vsub.f32 %v304, %v317
  %v331 = vsub.f32 %v305, %v318
  %v332 = vsub.f32 %v306, %v319
  %v333 = vsub.f32 %v307, %v320
  %335 = vset.pattern.permute.xlu0 0
  %336 = vperm.xlu0 %335, %v282
  %v337 = vpop.permute.xlu0 %336
  %340 = vset.pattern.permute.xlu0 0
  %341 = vperm.xlu0 %340, %v283
  %v342 = vpop.permute.xlu0 %341
  %345 = vset.pattern.permute.xlu0 0
  %346 = vperm.xlu0 %345, %v284
  %v347 = vpop.permute.xlu0 %346
  %350 = vset.pattern.permute.xlu0 0
  %351 = vperm.xlu0 %350, %v285
  %v352 = vpop.permute.xlu0 %351
  %355 = vset.pattern.permute.xlu0 0
  %356 = vperm.xlu0 %355, %v286
  %v357 = vpop.permute.xlu0 %356
  %360 = vset.pattern.permute.xlu0 0
  %361 = vperm.xlu0 %360, %v287
  %v362 = vpop.permute.xlu0 %361
  %365 = vset.pattern.permute.xlu0 0
  %366 = vperm.xlu0 %365, %v288
  %v367 = vpop.permute.xlu0 %366
  %370 = vset.pattern.permute.xlu0 0
  %371 = vperm.xlu0 %370, %v289
  %v372 = vpop.permute.xlu0 %371
  %375 = vset.pattern.permute.xlu0 0
  %376 = vperm.xlu0 %375, %v290
  %v377 = vpop.permute.xlu0 %376
  %380 = vset.pattern.permute.xlu0 0
  %381 = vperm.xlu0 %380, %v291
  %v382 = vpop.permute.xlu0 %381
  %385 = vset.pattern.permute.xlu0 0
  %386 = vperm.xlu0 %385, %v292
  %v387 = vpop.permute.xlu0 %386
  %390 = vset.pattern.permute.xlu0 0
  %391 = vperm.xlu0 %390, %v293
  %v392 = vpop.permute.xlu0 %391
  %395 = vset.pattern.permute.xlu0 0
  %396 = vperm.xlu0 %395, %v294
  %v397 = vpop.permute.xlu0 %396
  %v399 = vmul.f32 %v21, %v337
  %v400 = vmul.f32 %v22, %v337
  %v401 = vmul.f32 %v23, %v342
  %v402 = vmul.f32 %v24, %v342
  %v403 = vmul.f32 %v25, %v347
  %v404 = vmul.f32 %v26, %v347
  %v405 = vmul.f32 %v27, %v352
  %v406 = vmul.f32 %v28, %v352
  %v407 = vmul.f32 %v29, %v357
  %v408 = vmul.f32 %v30, %v357
  %v409 = vmul.f32 %v31, %v362
  %v410 = vmul.f32 %v32, %v362
  %v411 = vmul.f32 %v33, %v367
  %v412 = vmul.f32 %v34, %v367
  %v413 = vmul.f32 %v35, %v372
  %v414 = vmul.f32 %v36, %v372
  %v415 = vmul.f32 %v37, %v377
  %v416 = vmul.f32 %v38, %v377
  %v417 = vmul.f32 %v39, %v382
  %v418 = vmul.f32 %v40, %v382
  %v419 = vmul.f32 %v41, %v387
  %v420 = vmul.f32 %v42, %v387
  %v421 = vmul.f32 %v43, %v392
  %v422 = vmul.f32 %v44, %v392
  %v423 = vmul.f32 %v45, %v397
  %v424 = vmul.f32 %v46, %v397
  %426 = vset.pattern.permute.xlu0 0
  %427 = vperm.xlu0 %426, %v321
  %v428 = vpop.permute.xlu0 %427
  %431 = vset.pattern.permute.xlu0 0
  %432 = vperm.xlu0 %431, %v322
  %v433 = vpop.permute.xlu0 %432
  %436 = vset.pattern.permute.xlu0 0
  %437 = vperm.xlu0 %436, %v323
  %v438 = vpop.permute.xlu0 %437
  %441 = vset.pattern.permute.xlu0 0
  %442 = vperm.xlu0 %441, %v324
  %v443 = vpop.permute.xlu0 %442
  %446 = vset.pattern.permute.xlu0 0
  %447 = vperm.xlu0 %446, %v325
  %v448 = vpop.permute.xlu0 %447
  %451 = vset.pattern.permute.xlu0 0
  %452 = vperm.xlu0 %451, %v326
  %v453 = vpop.permute.xlu0 %452
  %456 = vset.pattern.permute.xlu0 0
  %457 = vperm.xlu0 %456, %v327
  %v458 = vpop.permute.xlu0 %457
  %461 = vset.pattern.permute.xlu0 0
  %462 = vperm.xlu0 %461, %v328
  %v463 = vpop.permute.xlu0 %462
  %466 = vset.pattern.permute.xlu0 0
  %467 = vperm.xlu0 %466, %v329
  %v468 = vpop.permute.xlu0 %467
  %471 = vset.pattern.permute.xlu0 0
  %472 = vperm.xlu0 %471, %v330
  %v473 = vpop.permute.xlu0 %472
  %476 = vset.pattern.permute.xlu0 0
  %477 = vperm.xlu0 %476, %v331
  %v478 = vpop.permute.xlu0 %477
  %481 = vset.pattern.permute.xlu0 0
  %482 = vperm.xlu0 %481, %v332
  %v483 = vpop.permute.xlu0 %482
  %486 = vset.pattern.permute.xlu0 0
  %487 = vperm.xlu0 %486, %v333
  %v488 = vpop.permute.xlu0 %487
  %v490 = vadd.f32 %v399, %v428
  %v491 = vadd.f32 %v400, %v428
  %v492 = vadd.f32 %v401, %v433
  %v493 = vadd.f32 %v402, %v433
  %v494 = vadd.f32 %v403, %v438
  %v495 = vadd.f32 %v404, %v438
  %v496 = vadd.f32 %v405, %v443
  %v497 = vadd.f32 %v406, %v443
  %v498 = vadd.f32 %v407, %v448
  %v499 = vadd.f32 %v408, %v448
  %v500 = vadd.f32 %v409, %v453
  %v501 = vadd.f32 %v410, %v453
  %v502 = vadd.f32 %v411, %v458
  %v503 = vadd.f32 %v412, %v458
  %v504 = vadd.f32 %v413, %v463
  %v505 = vadd.f32 %v414, %v463
  %v506 = vadd.f32 %v415, %v468
  %v507 = vadd.f32 %v416, %v468
  %v508 = vadd.f32 %v417, %v473
  %v509 = vadd.f32 %v418, %v473
  %v510 = vadd.f32 %v419, %v478
  %v511 = vadd.f32 %v420, %v478
  %v512 = vadd.f32 %v421, %v483
  %v513 = vadd.f32 %v422, %v483
  %v514 = vadd.f32 %v423, %v488
  %v515 = vadd.f32 %v424, %v488
  %v516 = vld [vmem:[%s1] sm:$0xff]
  %v517 = vld [vmem:[%s1 + $0x8] sm:$0xff]
  %v518 = vld [vmem:[%s1 + $0x10] sm:$0xff]
  %v519 = vld [vmem:[%s1 + $0x18] sm:$0xff]
  %v520 = vld [vmem:[%s1 + $0x20] sm:$0xff]
  %v521 = vld [vmem:[%s1 + $0x28] sm:$0xff]
  %v522 = vld [vmem:[%s1 + $0x30] sm:$0xff]
  %v523 = vld [vmem:[%s1 + $0x38] sm:$0xff]
  %v524 = vld [vmem:[%s1 + $0x40] sm:$0xff]
  %v525 = vld [vmem:[%s1 + $0x48] sm:$0xff]
  %v526 = vld [vmem:[%s1 + $0x50] sm:$0xff]
  %v527 = vld [vmem:[%s1 + $0x58] sm:$0xff]
  %v528 = vld [vmem:[%s1 + $0x60] sm:$0xff]
  %v529 = vld [vmem:[%s1 + $0x68] sm:$0xff]
  %v530 = vld [vmem:[%s1 + $0x70] sm:$0xff]
  %v531 = vld [vmem:[%s1 + $0x78] sm:$0xff]
  %v532 = vld [vmem:[%s1 + $0x80] sm:$0xff]
  %v533 = vld [vmem:[%s1 + $0x88] sm:$0xff]
  %v534 = vld [vmem:[%s1 + $0x90] sm:$0xff]
  %v535 = vld [vmem:[%s1 + $0x98] sm:$0xff]
  %v536 = vld [vmem:[%s1 + $0xa0] sm:$0xff]
  %v537 = vld [vmem:[%s1 + $0xa8] sm:$0xff]
  %v538 = vld [vmem:[%s1 + $0xb0] sm:$0xff]
  %v539 = vld [vmem:[%s1 + $0xb8] sm:$0xff]
  %v540 = vld [vmem:[%s1 + $0xc0] sm:$0xff]
  %v541 = vld [vmem:[%s1 + $0xc8] sm:$0xff]
  %v542 = vadd.f32 %v490, %v516
  %v543 = vadd.f32 %v491, %v517
  %v544 = vadd.f32 %v492, %v518
  %v545 = vadd.f32 %v493, %v519
  %v546 = vadd.f32 %v494, %v520
  %v547 = vadd.f32 %v495, %v521
  %v548 = vadd.f32 %v496, %v522
  %v549 = vadd.f32 %v497, %v523
  %v550 = vadd.f32 %v498, %v524
  %v551 = vadd.f32 %v499, %v525
  %v552 = vadd.f32 %v500, %v526
  %v553 = vadd.f32 %v501, %v527
  %v554 = vadd.f32 %v502, %v528
  %v555 = vadd.f32 %v503, %v529
  %v556 = vadd.f32 %v504, %v530
  %v557 = vadd.f32 %v505, %v531
  %v558 = vadd.f32 %v506, %v532
  %v559 = vadd.f32 %v507, %v533
  %v560 = vadd.f32 %v508, %v534
  %v561 = vadd.f32 %v509, %v535
  %v562 = vadd.f32 %v510, %v536
  %v563 = vadd.f32 %v511, %v537
  %v564 = vadd.f32 %v512, %v538
  %v565 = vadd.f32 %v513, %v539
  %v566 = vadd.f32 %v514, %v540
  %v567 = vadd.f32 %v515, %v541
  %v568 = vld [vmem:[%s4] sm:$0xf]
  %v569 = vld [vmem:[%s4 + $0x4] sm:$0xf]
  %v570 = vld [vmem:[%s4 + $0x8] sm:$0xf]
  %v571 = vld [vmem:[%s4 + $0xc] sm:$0xf]
  %v572 = vld [vmem:[%s4 + $0x10] sm:$0xf]
  %v573 = vld [vmem:[%s4 + $0x14] sm:$0xf]
  %v574 = vld [vmem:[%s4 + $0x18] sm:$0xf]
  %v575 = vld [vmem:[%s4 + $0x1c] sm:$0xf]
  %v576 = vld [vmem:[%s4 + $0x20] sm:$0xf]
  %v577 = vld [vmem:[%s4 + $0x24] sm:$0xf]
  %v578 = vld [vmem:[%s4 + $0x28] sm:$0xf]
  %v579 = vld [vmem:[%s4 + $0x2c] sm:$0xf]
  %v580 = vld [vmem:[%s4 + $0x30] sm:$0xf]
  %v581 = vld [vmem:[%s4 + $0x34] sm:$0xf]
  %v582 = vld [vmem:[%s4 + $0x38] sm:$0xf]
  %v583 = vld [vmem:[%s4 + $0x3c] sm:$0xf]
  %v584 = vld [vmem:[%s4 + $0x40] sm:$0xf]
  %v585 = vld [vmem:[%s4 + $0x44] sm:$0xf]
  %v586 = vld [vmem:[%s4 + $0x48] sm:$0xf]
  %v587 = vld [vmem:[%s4 + $0x4c] sm:$0xf]
  %v588 = vld [vmem:[%s4 + $0x50] sm:$0xf]
  %v589 = vld [vmem:[%s4 + $0x54] sm:$0xf]
  %v590 = vld [vmem:[%s4 + $0x58] sm:$0xf]
  %v591 = vld [vmem:[%s4 + $0x5c] sm:$0xf]
  %v592 = vld [vmem:[%s4 + $0x60] sm:$0xf]
  %v593 = vld [vmem:[%s4 + $0x64] sm:$0xf]
  %v594 = vld [vmem:[%s4 + $0x68] sm:$0xf]
  %v595 = vld [vmem:[%s4 + $0x6c] sm:$0xf]
  %v596 = vld [vmem:[%s4 + $0x70] sm:$0xf]
  %v597 = vld [vmem:[%s4 + $0x74] sm:$0xf]
  %v598 = vld [vmem:[%s4 + $0x78] sm:$0xf]
  %v599 = vld [vmem:[%s4 + $0x7c] sm:$0xf]
  %v600 = vld [vmem:[%s4 + $0x80] sm:$0xf]
  %v601 = vld [vmem:[%s4 + $0x84] sm:$0xf]
  %v602 = vld [vmem:[%s4 + $0x88] sm:$0xf]
  %v603 = vld [vmem:[%s4 + $0x8c] sm:$0xf]
  %v604 = vld [vmem:[%s4 + $0x90] sm:$0xf]
  %v605 = vld [vmem:[%s4 + $0x94] sm:$0xf]
  %v606 = vld [vmem:[%s4 + $0x98] sm:$0xf]
  %v607 = vld [vmem:[%s4 + $0x9c] sm:$0xf]
  %v608 = vld [vmem:[%s4 + $0xa0] sm:$0xf]
  %v609 = vld [vmem:[%s4 + $0xa4] sm:$0xf]
  %v610 = vld [vmem:[%s4 + $0xa8] sm:$0xf]
  %v611 = vld [vmem:[%s4 + $0xac] sm:$0xf]
  %v612 = vld [vmem:[%s4 + $0xb0] sm:$0xf]
  %v613 = vld [vmem:[%s4 + $0xb4] sm:$0xf]
  %v614 = vld [vmem:[%s4 + $0xb8] sm:$0xf]
  %v615 = vld [vmem:[%s4 + $0xbc] sm:$0xf]
  %v616 = vld [vmem:[%s4 + $0xc0] sm:$0xf]
  %v617 = vld [vmem:[%s4 + $0xc4] sm:$0xf]
  %v618 = vld [vmem:[%s4 + $0xc8] sm:$0xf]
  %v619 = vld [vmem:[%s4 + $0xcc] sm:$0xf]
  %v620 = vld [vmem:[%s4 + $0xd0] sm:$0xf]
  %v621 = vld [vmem:[%s4 + $0xd4] sm:$0xf]
  %v622 = vld [vmem:[%s4 + $0xd8] sm:$0xf]
  %v623 = vld [vmem:[%s4 + $0xdc] sm:$0xf]
  %v624 = vld [vmem:[%s4 + $0xe0] sm:$0xf]
  %v625 = vld [vmem:[%s4 + $0xe4] sm:$0xf]
  %v626 = vld [vmem:[%s4 + $0xe8] sm:$0xf]
  %v627 = vld [vmem:[%s4 + $0xec] sm:$0xf]
  %v628 = vld [vmem:[%s4 + $0xf0] sm:$0xf]
  %v629 = vld [vmem:[%s4 + $0xf4] sm:$0xf]
  %v630 = vld [vmem:[%s4 + $0xf8] sm:$0xf]
  %v631 = vld [vmem:[%s4 + $0xfc] sm:$0xf]
  %v632 = vld [vmem:[%s4 + $0x100] sm:$0xf]
  %v633 = vld [vmem:[%s4 + $0x104] sm:$0xf]
  %v634 = vld [vmem:[%s4 + $0x108] sm:$0xf]
  %v635 = vld [vmem:[%s4 + $0x10c] sm:$0xf]
  %v636 = vld [vmem:[%s4 + $0x110] sm:$0xf]
  %v637 = vld [vmem:[%s4 + $0x114] sm:$0xf]
  %v638 = vld [vmem:[%s4 + $0x118] sm:$0xf]
  %v639 = vld [vmem:[%s4 + $0x11c] sm:$0xf]
  %v640 = vld [vmem:[%s4 + $0x120] sm:$0xf]
  %v641 = vld [vmem:[%s4 + $0x124] sm:$0xf]
  %v642 = vld [vmem:[%s4 + $0x128] sm:$0xf]
  %v643 = vld [vmem:[%s4 + $0x12c] sm:$0xf]
  %v644 = vld [vmem:[%s4 + $0x130] sm:$0xf]
  %v645 = vld [vmem:[%s4 + $0x134] sm:$0xf]
  %v646 = vpack.c.bf16 %v544, %v542
  %v647 = vpack.c.bf16 %v545, %v543
  %v648 = vpack.c.bf16 %v548, %v546
  %v649 = vpack.c.bf16 %v549, %v547
  %v650 = vpack.c.bf16 %v552, %v550
  %v651 = vpack.c.bf16 %v553, %v551
  %v652 = vpack.c.bf16 %v556, %v554
  %v653 = vpack.c.bf16 %v557, %v555
  %v654 = vpack.c.bf16 %v560, %v558
  %v655 = vpack.c.bf16 %v561, %v559
  %v656 = vpack.c.bf16 %v564, %v562
  %v657 = vpack.c.bf16 %v565, %v563
  %v658 = vpack.c.bf16 %v566, %v566
  %v659 = vpack.c.bf16 %v567, %v567
  %v738 = vunpack.c.l.b16 %v568
  %v739 = vunpack.c.l.b16 %v569
  %v740 = vunpack.c.l.b16 %v570
  %v741 = vunpack.c.l.b16 %v571
  %v742 = vunpack.c.l.b16 %v572
  %v743 = vunpack.c.l.b16 %v573
  %v744 = vunpack.c.l.b16 %v574
  %v745 = vunpack.c.l.b16 %v575
  %v746 = vunpack.c.l.b16 %v576
  %v747 = vunpack.c.l.b16 %v577
  %v748 = vunpack.c.l.b16 %v578
  %v749 = vunpack.c.l.b16 %v579
  %v750 = vunpack.c.l.b16 %v580
  %v751 = vunpack.c.l.b16 %v581
  %v752 = vunpack.c.l.b16 %v582
  %v753 = vunpack.c.l.b16 %v583
  %v754 = vunpack.c.l.b16 %v584
  %v755 = vunpack.c.l.b16 %v585
  %v756 = vunpack.c.l.b16 %v586
  %v757 = vunpack.c.l.b16 %v587
  %v758 = vunpack.c.l.b16 %v588
  %v759 = vunpack.c.l.b16 %v589
  %v760 = vunpack.c.l.b16 %v590
  %v761 = vunpack.c.l.b16 %v591
  %v762 = vunpack.c.l.b16 %v592
  %v763 = vunpack.c.l.b16 %v593
  %v764 = vunpack.c.l.b16 %v594
  %v765 = vunpack.c.l.b16 %v595
  %v766 = vunpack.c.l.b16 %v596
  %v767 = vunpack.c.l.b16 %v597
  %v768 = vunpack.c.l.b16 %v598
  %v769 = vunpack.c.l.b16 %v599
  %v770 = vunpack.c.l.b16 %v600
  %v771 = vunpack.c.l.b16 %v601
  %v772 = vunpack.c.l.b16 %v602
  %v773 = vunpack.c.l.b16 %v603
  %v774 = vunpack.c.l.b16 %v604
  %v775 = vunpack.c.l.b16 %v605
  %v776 = vunpack.c.l.b16 %v606
  %v777 = vunpack.c.l.b16 %v607
  %v778 = vunpack.c.l.b16 %v608
  %v779 = vunpack.c.l.b16 %v609
  %v780 = vunpack.c.l.b16 %v610
  %v781 = vunpack.c.l.b16 %v611
  %v782 = vunpack.c.l.b16 %v612
  %v783 = vunpack.c.l.b16 %v613
  %v784 = vunpack.c.l.b16 %v614
  %v785 = vunpack.c.l.b16 %v615
  %v786 = vunpack.c.l.b16 %v616
  %v787 = vunpack.c.l.b16 %v617
  %v788 = vunpack.c.l.b16 %v618
  %v789 = vunpack.c.l.b16 %v619
  %v790 = vunpack.c.l.b16 %v620
  %v791 = vunpack.c.l.b16 %v621
  %v792 = vunpack.c.l.b16 %v622
  %v793 = vunpack.c.l.b16 %v623
  %v794 = vunpack.c.l.b16 %v624
  %v795 = vunpack.c.l.b16 %v625
  %v796 = vunpack.c.l.b16 %v626
  %v797 = vunpack.c.l.b16 %v627
  %v798 = vunpack.c.l.b16 %v628
  %v799 = vunpack.c.l.b16 %v629
  %v800 = vunpack.c.l.b16 %v630
  %v801 = vunpack.c.l.b16 %v631
  %v802 = vunpack.c.l.b16 %v632
  %v803 = vunpack.c.l.b16 %v633
  %v804 = vunpack.c.l.b16 %v634
  %v805 = vunpack.c.l.b16 %v635
  %v806 = vunpack.c.l.b16 %v636
  %v807 = vunpack.c.l.b16 %v637
  %v808 = vunpack.c.l.b16 %v638
  %v809 = vunpack.c.l.b16 %v639
  %v810 = vunpack.c.l.b16 %v640
  %v811 = vunpack.c.l.b16 %v641
  %v812 = vunpack.c.l.b16 %v642
  %v813 = vunpack.c.l.b16 %v643
  %v814 = vunpack.c.l.b16 %v644
  %v815 = vunpack.c.l.b16 %v645
  %v816 = vpack.c.b16 %v739, %v738
  %v817 = vpack.c.b16 %v741, %v740
  %v818 = vpack.c.b16 %v743, %v742
  %v819 = vpack.c.b16 %v745, %v744
  %v820 = vpack.c.b16 %v747, %v746
  %v821 = vpack.c.b16 %v749, %v748
  %v822 = vpack.c.b16 %v751, %v750
  %v823 = vpack.c.b16 %v753, %v752
  %v824 = vpack.c.b16 %v755, %v754
  %v825 = vpack.c.b16 %v757, %v756
  %v826 = vpack.c.b16 %v759, %v758
  %v827 = vpack.c.b16 %v761, %v760
  %v828 = vpack.c.b16 %v763, %v762
  %v829 = vpack.c.b16 %v765, %v764
  %v830 = vpack.c.b16 %v767, %v766
  %v831 = vpack.c.b16 %v769, %v768
  %v832 = vpack.c.b16 %v771, %v770
  %v833 = vpack.c.b16 %v773, %v772
  %v834 = vpack.c.b16 %v775, %v774
  %v835 = vpack.c.b16 %v777, %v776
  %v836 = vpack.c.b16 %v779, %v778
  %v837 = vpack.c.b16 %v781, %v780
  %v838 = vpack.c.b16 %v783, %v782
  %v839 = vpack.c.b16 %v785, %v784
  %v840 = vpack.c.b16 %v787, %v786
  %v841 = vpack.c.b16 %v789, %v788
  %v842 = vpack.c.b16 %v791, %v790
  %v843 = vpack.c.b16 %v793, %v792
  %v844 = vpack.c.b16 %v795, %v794
  %v845 = vpack.c.b16 %v797, %v796
  %v846 = vpack.c.b16 %v799, %v798
  %v847 = vpack.c.b16 %v801, %v800
  %v848 = vpack.c.b16 %v803, %v802
  %v849 = vpack.c.b16 %v805, %v804
  %v850 = vpack.c.b16 %v807, %v806
  %v851 = vpack.c.b16 %v809, %v808
  %v852 = vpack.c.b16 %v811, %v810
  %v853 = vpack.c.b16 %v813, %v812
  %v854 = vpack.c.b16 %v815, %v814
  %vm855 = vcmask 850944
  %v857 = vsel %vm855, %v816, 0
  %v860 = vsel %vm855, %v817, 0
  %v863 = vsel %vm855, %v818, 0
  %v866 = vsel %vm855, %v819, 0
  %v869 = vsel %vm855, %v820, 0
  %v872 = vsel %vm855, %v821, 0
  %v875 = vsel %vm855, %v822, 0
  %v878 = vsel %vm855, %v823, 0
  %v881 = vsel %vm855, %v824, 0
  %v884 = vsel %vm855, %v825, 0
  %v887 = vsel %vm855, %v826, 0
  %v890 = vsel %vm855, %v827, 0
  %v893 = vsel %vm855, %v828, 0
  %v896 = vsel %vm855, %v829, 0
  %v899 = vsel %vm855, %v830, 0
  %v902 = vsel %vm855, %v831, 0
  %v905 = vsel %vm855, %v832, 0
  %v908 = vsel %vm855, %v833, 0
  %v911 = vsel %vm855, %v834, 0
  %v914 = vsel %vm855, %v835, 0
  %v917 = vsel %vm855, %v836, 0
  %v920 = vsel %vm855, %v837, 0
  %v923 = vsel %vm855, %v838, 0
  %v926 = vsel %vm855, %v839, 0
  %v929 = vsel %vm855, %v840, 0
  %v932 = vsel %vm855, %v841, 0
  %v935 = vsel %vm855, %v842, 0
  %v938 = vsel %vm855, %v843, 0
  %v941 = vsel %vm855, %v844, 0
  %v944 = vsel %vm855, %v845, 0
  %v947 = vsel %vm855, %v846, 0
  %v950 = vsel %vm855, %v847, 0
  %v953 = vsel %vm855, %v848, 0
  %v956 = vsel %vm855, %v849, 0
  %v959 = vsel %vm855, %v850, 0
  %v962 = vsel %vm855, %v851, 0
  %v965 = vsel %vm855, %v852, 0
  %v968 = vsel %vm855, %v853, 0
  %v971 = vsel %vm855, %v854, 0
  %vm973 = vcmask 1043456
  %v975 = vsel %vm973, %v658, 0
  %v978 = vsel %vm973, %v659, 0
  %980 = vmatprep.subr.bf16.mxu0 0
  %981 = vmatpush1.bf16.msra.mxu0 0
  %982 = vmatprep.subr.bf16.mxu0 %v978
  %983 = vmatpush1.bf16.msra.mxu0 %v975
  %984 = vmatprep.subr.bf16.mxu0 %v657
  %985 = vmatpush1.bf16.msra.mxu0 %v656
  %986 = vmatprep.subr.bf16.mxu0 %v655
  %987 = vmatpush1.bf16.msra.mxu0 %v654
  %988 = vmatprep.subr.bf16.mxu0 %v653
  %989 = vmatpush1.bf16.msra.mxu0 %v652
  %990 = vmatprep.subr.bf16.mxu0 %v651
  %991 = vmatpush1.bf16.msra.mxu0 %v650
  %992 = vmatprep.subr.bf16.mxu0 %v649
  %993 = vmatpush1.bf16.msra.mxu0 %v648
  %994 = vmatprep.subr.bf16.mxu0 %v647
  %995 = vmatpush1.bf16.msra.mxu0 %v646
  %996 = vmatprep.subr.bf16.mxu0 0
  %997 = vmatpush2.bf16.msra.mxu0 0
  %998 = vmatprep.subr.bf16.mxu0 0
  %999 = vmatpush2.bf16.msra.mxu0 0
  %1000 = vmatprep.subr.bf16.mxu0 0
  %1001 = vmatpush2.bf16.msra.mxu0 0
  %1002 = vmatprep.subr.bf16.mxu0 0
  %1003 = vmatpush2.bf16.msra.mxu0 0
  %1004 = vmatprep.subr.bf16.mxu0 0
  %1005 = vmatpush2.bf16.msra.mxu0 0
  %1006 = vmatprep.subr.bf16.mxu0 0
  %1007 = vmatpush2.bf16.msra.mxu0 0
  %1008 = vmatprep.subr.bf16.mxu0 0
  %1009 = vmatpush2.bf16.msra.mxu0 0
  %1010 = vmatprep.subr.bf16.mxu0 0
  %1011 = vmatpush2.bf16.msra.mxu0 0
  %1012 = vmatprep.mubr.bf16.mxu0 0
  %1013 = vmatmul.mubr.bf16.gmra.mxu0 %v857
  %v1014 = vpop.f32.mrf.mxu0
  %v1015 = vadd.f32 0.0, %v1014
  %v1016 = vpop.f32.mrf.mxu0
  %v1017 = vadd.f32 0.0, %v1016
  %v1018 = vpop.f32.mrf.mxu0
  %v1019 = vadd.f32 0.0, %v1018
  %v1020 = vpop.f32.mrf.mxu0
  %v1021 = vadd.f32 0.0, %v1020
  %1022 = vmatprep.mubr.bf16.mxu0 0
  %1023 = vmatmul.mubr.bf16.gmra.mxu0 %v860
  %v1024 = vpop.f32.mrf.mxu0
  %v1025 = vadd.f32 0.0, %v1024
  %v1026 = vpop.f32.mrf.mxu0
  %v1027 = vadd.f32 0.0, %v1026
  %v1028 = vpop.f32.mrf.mxu0
  %v1029 = vadd.f32 0.0, %v1028
  %v1030 = vpop.f32.mrf.mxu0
  %v1031 = vadd.f32 0.0, %v1030
  %1032 = vmatprep.mubr.bf16.mxu0 0
  %1033 = vmatmul.mubr.bf16.gmra.mxu0 %v863
  %v1034 = vpop.f32.mrf.mxu0
  %v1035 = vadd.f32 0.0, %v1034
  %v1036 = vpop.f32.mrf.mxu0
  %v1037 = vadd.f32 0.0, %v1036
  %v1038 = vpop.f32.mrf.mxu0
  %v1039 = vadd.f32 0.0, %v1038
  %v1040 = vpop.f32.mrf.mxu0
  %v1041 = vadd.f32 0.0, %v1040
  %1042 = vmatprep.mubr.bf16.mxu0 0
  %1043 = vmatmul.mubr.bf16.gmra.mxu0 %v866
  %v1044 = vpop.f32.mrf.mxu0
  %v1045 = vadd.f32 0.0, %v1044
  %v1046 = vpop.f32.mrf.mxu0
  %v1047 = vadd.f32 0.0, %v1046
  %v1048 = vpop.f32.mrf.mxu0
  %v1049 = vadd.f32 0.0, %v1048
  %v1050 = vpop.f32.mrf.mxu0
  %v1051 = vadd.f32 0.0, %v1050
  %1052 = vmatprep.mubr.bf16.mxu0 0
  %1053 = vmatmul.mubr.bf16.gmra.mxu0 %v869
  %v1054 = vpop.f32.mrf.mxu0
  %v1055 = vadd.f32 0.0, %v1054
  %v1056 = vpop.f32.mrf.mxu0
  %v1057 = vadd.f32 0.0, %v1056
  %v1058 = vpop.f32.mrf.mxu0
  %v1059 = vadd.f32 0.0, %v1058
  %v1060 = vpop.f32.mrf.mxu0
  %v1061 = vadd.f32 0.0, %v1060
  %1062 = vmatprep.mubr.bf16.mxu0 0
  %1063 = vmatmul.mubr.bf16.gmra.mxu0 %v872
  %v1064 = vpop.f32.mrf.mxu0
  %v1065 = vadd.f32 0.0, %v1064
  %v1066 = vpop.f32.mrf.mxu0
  %v1067 = vadd.f32 0.0, %v1066
  %v1068 = vpop.f32.mrf.mxu0
  %v1069 = vadd.f32 0.0, %v1068
  %v1070 = vpop.f32.mrf.mxu0
  %v1071 = vadd.f32 0.0, %v1070
  %1072 = vmatprep.mubr.bf16.mxu0 0
  %1073 = vmatmul.mubr.bf16.gmra.mxu0 %v875
  %v1074 = vpop.f32.mrf.mxu0
  %v1075 = vadd.f32 0.0, %v1074
  %v1076 = vpop.f32.mrf.mxu0
  %v1077 = vadd.f32 0.0, %v1076
  %v1078 = vpop.f32.mrf.mxu0
  %v1079 = vadd.f32 0.0, %v1078
  %v1080 = vpop.f32.mrf.mxu0
  %v1081 = vadd.f32 0.0, %v1080
  %1082 = vmatprep.mubr.bf16.mxu0 0
  %1083 = vmatmul.mubr.bf16.gmra.mxu0 %v878
  %v1084 = vpop.f32.mrf.mxu0
  %v1085 = vadd.f32 0.0, %v1084
  %v1086 = vpop.f32.mrf.mxu0
  %v1087 = vadd.f32 0.0, %v1086
  %v1088 = vpop.f32.mrf.mxu0
  %v1089 = vadd.f32 0.0, %v1088
  %v1090 = vpop.f32.mrf.mxu0
  %v1091 = vadd.f32 0.0, %v1090
  %1092 = vmatprep.mubr.bf16.mxu0 0
  %1093 = vmatmul.mubr.bf16.gmra.mxu0 %v881
  %v1094 = vpop.f32.mrf.mxu0
  %v1095 = vadd.f32 0.0, %v1094
  %v1096 = vpop.f32.mrf.mxu0
  %v1097 = vadd.f32 0.0, %v1096
  %v1098 = vpop.f32.mrf.mxu0
  %v1099 = vadd.f32 0.0, %v1098
  %v1100 = vpop.f32.mrf.mxu0
  %v1101 = vadd.f32 0.0, %v1100
  %1102 = vmatprep.mubr.bf16.mxu0 0
  %1103 = vmatmul.mubr.bf16.gmra.mxu0 %v884
  %v1104 = vpop.f32.mrf.mxu0
  %v1105 = vadd.f32 0.0, %v1104
  %v1106 = vpop.f32.mrf.mxu0
  %v1107 = vadd.f32 0.0, %v1106
  %v1108 = vpop.f32.mrf.mxu0
  %v1109 = vadd.f32 0.0, %v1108
  %v1110 = vpop.f32.mrf.mxu0
  %v1111 = vadd.f32 0.0, %v1110
  %1112 = vmatprep.mubr.bf16.mxu0 0
  %1113 = vmatmul.mubr.bf16.gmra.mxu0 %v887
  %v1114 = vpop.f32.mrf.mxu0
  %v1115 = vadd.f32 0.0, %v1114
  %v1116 = vpop.f32.mrf.mxu0
  %v1117 = vadd.f32 0.0, %v1116
  %v1118 = vpop.f32.mrf.mxu0
  %v1119 = vadd.f32 0.0, %v1118
  %v1120 = vpop.f32.mrf.mxu0
  %v1121 = vadd.f32 0.0, %v1120
  %1122 = vmatprep.mubr.bf16.mxu0 0
  %1123 = vmatmul.mubr.bf16.gmra.mxu0 %v890
  %v1124 = vpop.f32.mrf.mxu0
  %v1125 = vadd.f32 0.0, %v1124
  %v1126 = vpop.f32.mrf.mxu0
  %v1127 = vadd.f32 0.0, %v1126
  %v1128 = vpop.f32.mrf.mxu0
  %v1129 = vadd.f32 0.0, %v1128
  %v1130 = vpop.f32.mrf.mxu0
  %v1131 = vadd.f32 0.0, %v1130
  %1132 = vmatprep.mubr.bf16.mxu0 0
  %1133 = vmatmul.mubr.bf16.gmra.mxu0 %v893
  %v1134 = vpop.f32.mrf.mxu0
  %v1135 = vadd.f32 0.0, %v1134
  %v1136 = vpop.f32.mrf.mxu0
  %v1137 = vadd.f32 0.0, %v1136
  %v1138 = vpop.f32.mrf.mxu0
  %v1139 = vadd.f32 0.0, %v1138
  %v1140 = vpop.f32.mrf.mxu0
  %v1141 = vadd.f32 0.0, %v1140
  %1142 = vmatprep.mubr.bf16.mxu0 0
  %1143 = vmatmul.mubr.bf16.gmra.mxu0 %v896
  %v1144 = vpop.f32.mrf.mxu0
  %v1145 = vadd.f32 0.0, %v1144
  %v1146 = vpop.f32.mrf.mxu0
  %v1147 = vadd.f32 0.0, %v1146
  %v1148 = vpop.f32.mrf.mxu0
  %v1149 = vadd.f32 0.0, %v1148
  %v1150 = vpop.f32.mrf.mxu0
  %v1151 = vadd.f32 0.0, %v1150
  %1152 = vmatprep.mubr.bf16.mxu0 0
  %1153 = vmatmul.mubr.bf16.gmra.mxu0 %v899
  %v1154 = vpop.f32.mrf.mxu0
  %v1155 = vadd.f32 0.0, %v1154
  %v1156 = vpop.f32.mrf.mxu0
  %v1157 = vadd.f32 0.0, %v1156
  %v1158 = vpop.f32.mrf.mxu0
  %v1159 = vadd.f32 0.0, %v1158
  %v1160 = vpop.f32.mrf.mxu0
  %v1161 = vadd.f32 0.0, %v1160
  %1162 = vmatprep.mubr.bf16.mxu0 0
  %1163 = vmatmul.mubr.bf16.gmra.mxu0 %v902
  %v1164 = vpop.f32.mrf.mxu0
  %v1165 = vadd.f32 0.0, %v1164
  %v1166 = vpop.f32.mrf.mxu0
  %v1167 = vadd.f32 0.0, %v1166
  %v1168 = vpop.f32.mrf.mxu0
  %v1169 = vadd.f32 0.0, %v1168
  %v1170 = vpop.f32.mrf.mxu0
  %v1171 = vadd.f32 0.0, %v1170
  %1172 = vmatprep.mubr.bf16.mxu0 0
  %1173 = vmatmul.mubr.bf16.gmra.mxu0 %v905
  %v1174 = vpop.f32.mrf.mxu0
  %v1175 = vadd.f32 0.0, %v1174
  %v1176 = vpop.f32.mrf.mxu0
  %v1177 = vadd.f32 0.0, %v1176
  %v1178 = vpop.f32.mrf.mxu0
  %v1179 = vadd.f32 0.0, %v1178
  %v1180 = vpop.f32.mrf.mxu0
  %v1181 = vadd.f32 0.0, %v1180
  %1182 = vmatprep.mubr.bf16.mxu0 0
  %1183 = vmatmul.mubr.bf16.gmra.mxu0 %v908
  %v1184 = vpop.f32.mrf.mxu0
  %v1185 = vadd.f32 0.0, %v1184
  %v1186 = vpop.f32.mrf.mxu0
  %v1187 = vadd.f32 0.0, %v1186
  %v1188 = vpop.f32.mrf.mxu0
  %v1189 = vadd.f32 0.0, %v1188
  %v1190 = vpop.f32.mrf.mxu0
  %v1191 = vadd.f32 0.0, %v1190
  %1192 = vmatprep.mubr.bf16.mxu0 0
  %1193 = vmatmul.mubr.bf16.gmra.mxu0 %v911
  %v1194 = vpop.f32.mrf.mxu0
  %v1195 = vadd.f32 0.0, %v1194
  %v1196 = vpop.f32.mrf.mxu0
  %v1197 = vadd.f32 0.0, %v1196
  %v1198 = vpop.f32.mrf.mxu0
  %v1199 = vadd.f32 0.0, %v1198
  %v1200 = vpop.f32.mrf.mxu0
  %v1201 = vadd.f32 0.0, %v1200
  %1202 = vmatprep.mubr.bf16.mxu0 0
  %1203 = vmatmul.mubr.bf16.gmra.mxu0 %v914
  %v1204 = vpop.f32.mrf.mxu0
  %v1205 = vadd.f32 0.0, %v1204
  %v1206 = vpop.f32.mrf.mxu0
  %v1207 = vadd.f32 0.0, %v1206
  %v1208 = vpop.f32.mrf.mxu0
  %v1209 = vadd.f32 0.0, %v1208
  %v1210 = vpop.f32.mrf.mxu0
  %v1211 = vadd.f32 0.0, %v1210
  %1212 = vmatprep.mubr.bf16.mxu0 0
  %1213 = vmatmul.mubr.bf16.gmra.mxu0 %v917
  %v1214 = vpop.f32.mrf.mxu0
  %v1215 = vadd.f32 0.0, %v1214
  %v1216 = vpop.f32.mrf.mxu0
  %v1217 = vadd.f32 0.0, %v1216
  %v1218 = vpop.f32.mrf.mxu0
  %v1219 = vadd.f32 0.0, %v1218
  %v1220 = vpop.f32.mrf.mxu0
  %v1221 = vadd.f32 0.0, %v1220
  %1222 = vmatprep.mubr.bf16.mxu0 0
  %1223 = vmatmul.mubr.bf16.gmra.mxu0 %v920
  %v1224 = vpop.f32.mrf.mxu0
  %v1225 = vadd.f32 0.0, %v1224
  %v1226 = vpop.f32.mrf.mxu0
  %v1227 = vadd.f32 0.0, %v1226
  %v1228 = vpop.f32.mrf.mxu0
  %v1229 = vadd.f32 0.0, %v1228
  %v1230 = vpop.f32.mrf.mxu0
  %v1231 = vadd.f32 0.0, %v1230
  %1232 = vmatprep.mubr.bf16.mxu0 0
  %1233 = vmatmul.mubr.bf16.gmra.mxu0 %v923
  %v1234 = vpop.f32.mrf.mxu0
  %v1235 = vadd.f32 0.0, %v1234
  %v1236 = vpop.f32.mrf.mxu0
  %v1237 = vadd.f32 0.0, %v1236
  %v1238 = vpop.f32.mrf.mxu0
  %v1239 = vadd.f32 0.0, %v1238
  %v1240 = vpop.f32.mrf.mxu0
  %v1241 = vadd.f32 0.0, %v1240
  %1242 = vmatprep.mubr.bf16.mxu0 0
  %1243 = vmatmul.mubr.bf16.gmra.mxu0 %v926
  %v1244 = vpop.f32.mrf.mxu0
  %v1245 = vadd.f32 0.0, %v1244
  %v1246 = vpop.f32.mrf.mxu0
  %v1247 = vadd.f32 0.0, %v1246
  %v1248 = vpop.f32.mrf.mxu0
  %v1249 = vadd.f32 0.0, %v1248
  %v1250 = vpop.f32.mrf.mxu0
  %v1251 = vadd.f32 0.0, %v1250
  %1252 = vmatprep.mubr.bf16.mxu0 0
  %1253 = vmatmul.mubr.bf16.gmra.mxu0 %v929
  %v1254 = vpop.f32.mrf.mxu0
  %v1255 = vadd.f32 0.0, %v1254
  %v1256 = vpop.f32.mrf.mxu0
  %v1257 = vadd.f32 0.0, %v1256
  %v1258 = vpop.f32.mrf.mxu0
  %v1259 = vadd.f32 0.0, %v1258
  %v1260 = vpop.f32.mrf.mxu0
  %v1261 = vadd.f32 0.0, %v1260
  %1262 = vmatprep.mubr.bf16.mxu0 0
  %1263 = vmatmul.mubr.bf16.gmra.mxu0 %v932
  %v1264 = vpop.f32.mrf.mxu0
  %v1265 = vadd.f32 0.0, %v1264
  %v1266 = vpop.f32.mrf.mxu0
  %v1267 = vadd.f32 0.0, %v1266
  %v1268 = vpop.f32.mrf.mxu0
  %v1269 = vadd.f32 0.0, %v1268
  %v1270 = vpop.f32.mrf.mxu0
  %v1271 = vadd.f32 0.0, %v1270
  %1272 = vmatprep.mubr.bf16.mxu0 0
  %1273 = vmatmul.mubr.bf16.gmra.mxu0 %v935
  %v1274 = vpop.f32.mrf.mxu0
  %v1275 = vadd.f32 0.0, %v1274
  %v1276 = vpop.f32.mrf.mxu0
  %v1277 = vadd.f32 0.0, %v1276
  %v1278 = vpop.f32.mrf.mxu0
  %v1279 = vadd.f32 0.0, %v1278
  %v1280 = vpop.f32.mrf.mxu0
  %v1281 = vadd.f32 0.0, %v1280
  %1282 = vmatprep.mubr.bf16.mxu0 0
  %1283 = vmatmul.mubr.bf16.gmra.mxu0 %v938
  %v1284 = vpop.f32.mrf.mxu0
  %v1285 = vadd.f32 0.0, %v1284
  %v1286 = vpop.f32.mrf.mxu0
  %v1287 = vadd.f32 0.0, %v1286
  %v1288 = vpop.f32.mrf.mxu0
  %v1289 = vadd.f32 0.0, %v1288
  %v1290 = vpop.f32.mrf.mxu0
  %v1291 = vadd.f32 0.0, %v1290
  %1292 = vmatprep.mubr.bf16.mxu0 0
  %1293 = vmatmul.mubr.bf16.gmra.mxu0 %v941
  %v1294 = vpop.f32.mrf.mxu0
  %v1295 = vadd.f32 0.0, %v1294
  %v1296 = vpop.f32.mrf.mxu0
  %v1297 = vadd.f32 0.0, %v1296
  %v1298 = vpop.f32.mrf.mxu0
  %v1299 = vadd.f32 0.0, %v1298
  %v1300 = vpop.f32.mrf.mxu0
  %v1301 = vadd.f32 0.0, %v1300
  %1302 = vmatprep.mubr.bf16.mxu0 0
  %1303 = vmatmul.mubr.bf16.gmra.mxu0 %v944
  %v1304 = vpop.f32.mrf.mxu0
  %v1305 = vadd.f32 0.0, %v1304
  %v1306 = vpop.f32.mrf.mxu0
  %v1307 = vadd.f32 0.0, %v1306
  %v1308 = vpop.f32.mrf.mxu0
  %v1309 = vadd.f32 0.0, %v1308
  %v1310 = vpop.f32.mrf.mxu0
  %v1311 = vadd.f32 0.0, %v1310
  %1312 = vmatprep.mubr.bf16.mxu0 0
  %1313 = vmatmul.mubr.bf16.gmra.mxu0 %v947
  %v1314 = vpop.f32.mrf.mxu0
  %v1315 = vadd.f32 0.0, %v1314
  %v1316 = vpop.f32.mrf.mxu0
  %v1317 = vadd.f32 0.0, %v1316
  %v1318 = vpop.f32.mrf.mxu0
  %v1319 = vadd.f32 0.0, %v1318
  %v1320 = vpop.f32.mrf.mxu0
  %v1321 = vadd.f32 0.0, %v1320
  %1322 = vmatprep.mubr.bf16.mxu0 0
  %1323 = vmatmul.mubr.bf16.gmra.mxu0 %v950
  %v1324 = vpop.f32.mrf.mxu0
  %v1325 = vadd.f32 0.0, %v1324
  %v1326 = vpop.f32.mrf.mxu0
  %v1327 = vadd.f32 0.0, %v1326
  %v1328 = vpop.f32.mrf.mxu0
  %v1329 = vadd.f32 0.0, %v1328
  %v1330 = vpop.f32.mrf.mxu0
  %v1331 = vadd.f32 0.0, %v1330
  %1332 = vmatprep.mubr.bf16.mxu0 0
  %1333 = vmatmul.mubr.bf16.gmra.mxu0 %v953
  %v1334 = vpop.f32.mrf.mxu0
  %v1335 = vadd.f32 0.0, %v1334
  %v1336 = vpop.f32.mrf.mxu0
  %v1337 = vadd.f32 0.0, %v1336
  %v1338 = vpop.f32.mrf.mxu0
  %v1339 = vadd.f32 0.0, %v1338
  %v1340 = vpop.f32.mrf.mxu0
  %v1341 = vadd.f32 0.0, %v1340
  %1342 = vmatprep.mubr.bf16.mxu0 0
  %1343 = vmatmul.mubr.bf16.gmra.mxu0 %v956
  %v1344 = vpop.f32.mrf.mxu0
  %v1345 = vadd.f32 0.0, %v1344
  %v1346 = vpop.f32.mrf.mxu0
  %v1347 = vadd.f32 0.0, %v1346
  %v1348 = vpop.f32.mrf.mxu0
  %v1349 = vadd.f32 0.0, %v1348
  %v1350 = vpop.f32.mrf.mxu0
  %v1351 = vadd.f32 0.0, %v1350
  %1352 = vmatprep.mubr.bf16.mxu0 0
  %1353 = vmatmul.mubr.bf16.gmra.mxu0 %v959
  %v1354 = vpop.f32.mrf.mxu0
  %v1355 = vadd.f32 0.0, %v1354
  %v1356 = vpop.f32.mrf.mxu0
  %v1357 = vadd.f32 0.0, %v1356
  %v1358 = vpop.f32.mrf.mxu0
  %v1359 = vadd.f32 0.0, %v1358
  %v1360 = vpop.f32.mrf.mxu0
  %v1361 = vadd.f32 0.0, %v1360
  %1362 = vmatprep.mubr.bf16.mxu0 0
  %1363 = vmatmul.mubr.bf16.gmra.mxu0 %v962
  %v1364 = vpop.f32.mrf.mxu0
  %v1365 = vadd.f32 0.0, %v1364
  %v1366 = vpop.f32.mrf.mxu0
  %v1367 = vadd.f32 0.0, %v1366
  %v1368 = vpop.f32.mrf.mxu0
  %v1369 = vadd.f32 0.0, %v1368
  %v1370 = vpop.f32.mrf.mxu0
  %v1371 = vadd.f32 0.0, %v1370
  %1372 = vmatprep.mubr.bf16.mxu0 0
  %1373 = vmatmul.mubr.bf16.gmra.mxu0 %v965
  %v1374 = vpop.f32.mrf.mxu0
  %v1375 = vadd.f32 0.0, %v1374
  %v1376 = vpop.f32.mrf.mxu0
  %v1377 = vadd.f32 0.0, %v1376
  %v1378 = vpop.f32.mrf.mxu0
  %v1379 = vadd.f32 0.0, %v1378
  %v1380 = vpop.f32.mrf.mxu0
  %v1381 = vadd.f32 0.0, %v1380
  %1382 = vmatprep.mubr.bf16.mxu0 0
  %1383 = vmatmul.mubr.bf16.gmra.mxu0 %v968
  %v1384 = vpop.f32.mrf.mxu0
  %v1385 = vadd.f32 0.0, %v1384
  %v1386 = vpop.f32.mrf.mxu0
  %v1387 = vadd.f32 0.0, %v1386
  %v1388 = vpop.f32.mrf.mxu0
  %v1389 = vadd.f32 0.0, %v1388
  %v1390 = vpop.f32.mrf.mxu0
  %v1391 = vadd.f32 0.0, %v1390
  %1392 = vmatprep.mubr.bf16.mxu0 0
  %1393 = vmatmul.mubr.bf16.gmra.mxu0 %v971
  %v1394 = vpop.f32.mrf.mxu0
  %v1395 = vadd.f32 0.0, %v1394
  %v1396 = vpop.f32.mrf.mxu0
  %v1397 = vadd.f32 0.0, %v1396
  %v1398 = vpop.f32.mrf.mxu0
  %v1399 = vadd.f32 0.0, %v1398
  %v1400 = vpop.f32.mrf.mxu0
  %v1401 = vadd.f32 0.0, %v1400
  %1402 = vdwg.mxu0
  %1403 = vst [vmem:[%s5] sm:$0xff] %v1015
  %1404 = vst.msk [vmem:[%s5 + $0x8] sm:$0xff] %vm47, %v1017
  %1405 = vst [vmem:[%s5 + $0x10] sm:$0xff] %v1019
  %1406 = vst.msk [vmem:[%s5 + $0x18] sm:$0xff] %vm47, %v1021
  %1407 = vst [vmem:[%s5 + $0x20] sm:$0xff] %v1025
  %1408 = vst.msk [vmem:[%s5 + $0x28] sm:$0xff] %vm47, %v1027
  %1409 = vst [vmem:[%s5 + $0x30] sm:$0xff] %v1029
  %1410 = vst.msk [vmem:[%s5 + $0x38] sm:$0xff] %vm47, %v1031
  %1411 = vst [vmem:[%s5 + $0x40] sm:$0xff] %v1035
  %1412 = vst.msk [vmem:[%s5 + $0x48] sm:$0xff] %vm47, %v1037
  %1413 = vst [vmem:[%s5 + $0x50] sm:$0xff] %v1039
  %1414 = vst.msk [vmem:[%s5 + $0x58] sm:$0xff] %vm47, %v1041
  %1415 = vst [vmem:[%s5 + $0x60] sm:$0xff] %v1045
  %1416 = vst.msk [vmem:[%s5 + $0x68] sm:$0xff] %vm47, %v1047
  %1417 = vst [vmem:[%s5 + $0x70] sm:$0xff] %v1049
  %1418 = vst.msk [vmem:[%s5 + $0x78] sm:$0xff] %vm47, %v1051
  %1419 = vst [vmem:[%s5 + $0x80] sm:$0xff] %v1055
  %1420 = vst.msk [vmem:[%s5 + $0x88] sm:$0xff] %vm47, %v1057
  %1421 = vst [vmem:[%s5 + $0x90] sm:$0xff] %v1059
  %1422 = vst.msk [vmem:[%s5 + $0x98] sm:$0xff] %vm47, %v1061
  %1423 = vst [vmem:[%s5 + $0xa0] sm:$0xff] %v1065
  %1424 = vst.msk [vmem:[%s5 + $0xa8] sm:$0xff] %vm47, %v1067
  %1425 = vst [vmem:[%s5 + $0xb0] sm:$0xff] %v1069
  %1426 = vst.msk [vmem:[%s5 + $0xb8] sm:$0xff] %vm47, %v1071
  %1427 = vst [vmem:[%s5 + $0xc0] sm:$0xff] %v1075
  %1428 = vst.msk [vmem:[%s5 + $0xc8] sm:$0xff] %vm47, %v1077
  %1429 = vst [vmem:[%s5 + $0xd0] sm:$0xff] %v1079
  %1430 = vst.msk [vmem:[%s5 + $0xd8] sm:$0xff] %vm47, %v1081
  %1431 = vst [vmem:[%s5 + $0xe0] sm:$0xff] %v1085
  %1432 = vst.msk [vmem:[%s5 + $0xe8] sm:$0xff] %vm47, %v1087
  %1433 = vst [vmem:[%s5 + $0xf0] sm:$0xff] %v1089
  %1434 = vst.msk [vmem:[%s5 + $0xf8] sm:$0xff] %vm47, %v1091
  %1435 = vst [vmem:[%s5 + $0x100] sm:$0xff] %v1095
  %1436 = vst.msk [vmem:[%s5 + $0x108] sm:$0xff] %vm47, %v1097
  %1437 = vst [vmem:[%s5 + $0x110] sm:$0xff] %v1099
  %1438 = vst.msk [vmem:[%s5 + $0x118] sm:$0xff] %vm47, %v1101
  %1439 = vst [vmem:[%s5 + $0x120] sm:$0xff] %v1105
  %1440 = vst.msk [vmem:[%s5 + $0x128] sm:$0xff] %vm47, %v1107
  %1441 = vst [vmem:[%s5 + $0x130] sm:$0xff] %v1109
  %1442 = vst.msk [vmem:[%s5 + $0x138] sm:$0xff] %vm47, %v1111
  %1443 = vst [vmem:[%s5 + $0x140] sm:$0xff] %v1115
  %1444 = vst.msk [vmem:[%s5 + $0x148] sm:$0xff] %vm47, %v1117
  %1445 = vst [vmem:[%s5 + $0x150] sm:$0xff] %v1119
  %1446 = vst.msk [vmem:[%s5 + $0x158] sm:$0xff] %vm47, %v1121
  %1447 = vst [vmem:[%s5 + $0x160] sm:$0xff] %v1125
  %1448 = vst.msk [vmem:[%s5 + $0x168] sm:$0xff] %vm47, %v1127
  %1449 = vst [vmem:[%s5 + $0x170] sm:$0xff] %v1129
  %1450 = vst.msk [vmem:[%s5 + $0x178] sm:$0xff] %vm47, %v1131
  %1451 = vst [vmem:[%s5 + $0x180] sm:$0xff] %v1135
  %1452 = vst.msk [vmem:[%s5 + $0x188] sm:$0xff] %vm47, %v1137
  %1453 = vst [vmem:[%s5 + $0x190] sm:$0xff] %v1139
  %1454 = vst.msk [vmem:[%s5 + $0x198] sm:$0xff] %vm47, %v1141
  %1455 = vst [vmem:[%s5 + $0x1a0] sm:$0xff] %v1145
  %1456 = vst.msk [vmem:[%s5 + $0x1a8] sm:$0xff] %vm47, %v1147
  %1457 = vst [vmem:[%s5 + $0x1b0] sm:$0xff] %v1149
  %1458 = vst.msk [vmem:[%s5 + $0x1b8] sm:$0xff] %vm47, %v1151
  %1459 = vst [vmem:[%s5 + $0x1c0] sm:$0xff] %v1155
  %1460 = vst.msk [vmem:[%s5 + $0x1c8] sm:$0xff] %vm47, %v1157
  %1461 = vst [vmem:[%s5 + $0x1d0] sm:$0xff] %v1159
  %1462 = vst.msk [vmem:[%s5 + $0x1d8] sm:$0xff] %vm47, %v1161
  %1463 = vst [vmem:[%s5 + $0x1e0] sm:$0xff] %v1165
  %1464 = vst.msk [vmem:[%s5 + $0x1e8] sm:$0xff] %vm47, %v1167
  %1465 = vst [vmem:[%s5 + $0x1f0] sm:$0xff] %v1169
  %1466 = vst.msk [vmem:[%s5 + $0x1f8] sm:$0xff] %vm47, %v1171
  %1467 = vst [vmem:[%s5 + $0x200] sm:$0xff] %v1175
  %1468 = vst.msk [vmem:[%s5 + $0x208] sm:$0xff] %vm47, %v1177
  %1469 = vst [vmem:[%s5 + $0x210] sm:$0xff] %v1179
  %1470 = vst.msk [vmem:[%s5 + $0x218] sm:$0xff] %vm47, %v1181
  %1471 = vst [vmem:[%s5 + $0x220] sm:$0xff] %v1185
  %1472 = vst.msk [vmem:[%s5 + $0x228] sm:$0xff] %vm47, %v1187
  %1473 = vst [vmem:[%s5 + $0x230] sm:$0xff] %v1189
  %1474 = vst.msk [vmem:[%s5 + $0x238] sm:$0xff] %vm47, %v1191
  %1475 = vst [vmem:[%s5 + $0x240] sm:$0xff] %v1195
  %1476 = vst.msk [vmem:[%s5 + $0x248] sm:$0xff] %vm47, %v1197
  %1477 = vst [vmem:[%s5 + $0x250] sm:$0xff] %v1199
  %1478 = vst.msk [vmem:[%s5 + $0x258] sm:$0xff] %vm47, %v1201
  %1479 = vst [vmem:[%s5 + $0x260] sm:$0xff] %v1205
  %1480 = vst.msk [vmem:[%s5 + $0x268] sm:$0xff] %vm47, %v1207
  %1481 = vst [vmem:[%s5 + $0x270] sm:$0xff] %v1209
  %1482 = vst.msk [vmem:[%s5 + $0x278] sm:$0xff] %vm47, %v1211
  %1483 = vst [vmem:[%s5 + $0x280] sm:$0xff] %v1215
  %1484 = vst.msk [vmem:[%s5 + $0x288] sm:$0xff] %vm47, %v1217
  %1485 = vst [vmem:[%s5 + $0x290] sm:$0xff] %v1219
  %1486 = vst.msk [vmem:[%s5 + $0x298] sm:$0xff] %vm47, %v1221
  %1487 = vst [vmem:[%s5 + $0x2a0] sm:$0xff] %v1225
  %1488 = vst.msk [vmem:[%s5 + $0x2a8] sm:$0xff] %vm47, %v1227
  %1489 = vst [vmem:[%s5 + $0x2b0] sm:$0xff] %v1229
  %1490 = vst.msk [vmem:[%s5 + $0x2b8] sm:$0xff] %vm47, %v1231
  %1491 = vst [vmem:[%s5 + $0x2c0] sm:$0xff] %v1235
  %1492 = vst.msk [vmem:[%s5 + $0x2c8] sm:$0xff] %vm47, %v1237
  %1493 = vst [vmem:[%s5 + $0x2d0] sm:$0xff] %v1239
  %1494 = vst.msk [vmem:[%s5 + $0x2d8] sm:$0xff] %vm47, %v1241
  %1495 = vst [vmem:[%s5 + $0x2e0] sm:$0xff] %v1245
  %1496 = vst.msk [vmem:[%s5 + $0x2e8] sm:$0xff] %vm47, %v1247
  %1497 = vst [vmem:[%s5 + $0x2f0] sm:$0xff] %v1249
  %1498 = vst.msk [vmem:[%s5 + $0x2f8] sm:$0xff] %vm47, %v1251
  %1499 = vst [vmem:[%s5 + $0x300] sm:$0xff] %v1255
  %1500 = vst.msk [vmem:[%s5 + $0x308] sm:$0xff] %vm47, %v1257
  %1501 = vst [vmem:[%s5 + $0x310] sm:$0xff] %v1259
  %1502 = vst.msk [vmem:[%s5 + $0x318] sm:$0xff] %vm47, %v1261
  %1503 = vst [vmem:[%s5 + $0x320] sm:$0xff] %v1265
  %1504 = vst.msk [vmem:[%s5 + $0x328] sm:$0xff] %vm47, %v1267
  %1505 = vst [vmem:[%s5 + $0x330] sm:$0xff] %v1269
  %1506 = vst.msk [vmem:[%s5 + $0x338] sm:$0xff] %vm47, %v1271
  %1507 = vst [vmem:[%s5 + $0x340] sm:$0xff] %v1275
  %1508 = vst.msk [vmem:[%s5 + $0x348] sm:$0xff] %vm47, %v1277
  %1509 = vst [vmem:[%s5 + $0x350] sm:$0xff] %v1279
  %1510 = vst.msk [vmem:[%s5 + $0x358] sm:$0xff] %vm47, %v1281
  %1511 = vst [vmem:[%s5 + $0x360] sm:$0xff] %v1285
  %1512 = vst.msk [vmem:[%s5 + $0x368] sm:$0xff] %vm47, %v1287
  %1513 = vst [vmem:[%s5 + $0x370] sm:$0xff] %v1289
  %1514 = vst.msk [vmem:[%s5 + $0x378] sm:$0xff] %vm47, %v1291
  %1515 = vst [vmem:[%s5 + $0x380] sm:$0xff] %v1295
  %1516 = vst.msk [vmem:[%s5 + $0x388] sm:$0xff] %vm47, %v1297
  %1517 = vst [vmem:[%s5 + $0x390] sm:$0xff] %v1299
  %1518 = vst.msk [vmem:[%s5 + $0x398] sm:$0xff] %vm47, %v1301
  %1519 = vst [vmem:[%s5 + $0x3a0] sm:$0xff] %v1305
  %1520 = vst.msk [vmem:[%s5 + $0x3a8] sm:$0xff] %vm47, %v1307
  %1521 = vst [vmem:[%s5 + $0x3b0] sm:$0xff] %v1309
  %1522 = vst.msk [vmem:[%s5 + $0x3b8] sm:$0xff] %vm47, %v1311
  %1523 = vst [vmem:[%s5 + $0x3c0] sm:$0xff] %v1315
  %1524 = vst.msk [vmem:[%s5 + $0x3c8] sm:$0xff] %vm47, %v1317
  %1525 = vst [vmem:[%s5 + $0x3d0] sm:$0xff] %v1319
  %1526 = vst.msk [vmem:[%s5 + $0x3d8] sm:$0xff] %vm47, %v1321
  %1527 = vst [vmem:[%s5 + $0x3e0] sm:$0xff] %v1325
  %1528 = vst.msk [vmem:[%s5 + $0x3e8] sm:$0xff] %vm47, %v1327
  %1529 = vst [vmem:[%s5 + $0x3f0] sm:$0xff] %v1329
  %1530 = vst.msk [vmem:[%s5 + $0x3f8] sm:$0xff] %vm47, %v1331
  %1531 = vst [vmem:[%s5 + $0x400] sm:$0xff] %v1335
  %1532 = vst.msk [vmem:[%s5 + $0x408] sm:$0xff] %vm47, %v1337
  %1533 = vst [vmem:[%s5 + $0x410] sm:$0xff] %v1339
  %1534 = vst.msk [vmem:[%s5 + $0x418] sm:$0xff] %vm47, %v1341
  %1535 = vst [vmem:[%s5 + $0x420] sm:$0xff] %v1345
  %1536 = vst.msk [vmem:[%s5 + $0x428] sm:$0xff] %vm47, %v1347
  %1537 = vst [vmem:[%s5 + $0x430] sm:$0xff] %v1349
  %1538 = vst.msk [vmem:[%s5 + $0x438] sm:$0xff] %vm47, %v1351
  %1539 = vst [vmem:[%s5 + $0x440] sm:$0xff] %v1355
  %1540 = vst.msk [vmem:[%s5 + $0x448] sm:$0xff] %vm47, %v1357
  %1541 = vst [vmem:[%s5 + $0x450] sm:$0xff] %v1359
  %1542 = vst.msk [vmem:[%s5 + $0x458] sm:$0xff] %vm47, %v1361
  %1543 = vst [vmem:[%s5 + $0x460] sm:$0xff] %v1365
  %1544 = vst.msk [vmem:[%s5 + $0x468] sm:$0xff] %vm47, %v1367
  %1545 = vst [vmem:[%s5 + $0x470] sm:$0xff] %v1369
  %1546 = vst.msk [vmem:[%s5 + $0x478] sm:$0xff] %vm47, %v1371
  %1547 = vst [vmem:[%s5 + $0x480] sm:$0xff] %v1375
  %1548 = vst.msk [vmem:[%s5 + $0x488] sm:$0xff] %vm47, %v1377
  %1549 = vst [vmem:[%s5 + $0x490] sm:$0xff] %v1379
  %1550 = vst.msk [vmem:[%s5 + $0x498] sm:$0xff] %vm47, %v1381
  %1551 = vst [vmem:[%s5 + $0x4a0] sm:$0xff] %v1385
  %1552 = vst.msk [vmem:[%s5 + $0x4a8] sm:$0xff] %vm47, %v1387
  %1553 = vst [vmem:[%s5 + $0x4b0] sm:$0xff] %v1389
  %1554 = vst.msk [vmem:[%s5 + $0x4b8] sm:$0xff] %vm47, %v1391
  %1555 = vst [vmem:[%s5 + $0x4c0] sm:$0xff] %v1395
  %1556 = vst.msk [vmem:[%s5 + $0x4c8] sm:$0xff] %vm47, %v1397
  %1557 = vst [vmem:[%s5 + $0x4d0] sm:$0xff] %v1399
  %1558 = vst.msk [vmem:[%s5 + $0x4d8] sm:$0xff] %vm47, %v1401
  // Predicated region
  $region22: #{bn_add_conv.1} parent=0 // pred_check
    _
  $region23: #{bn_add_conv.1} parent=0 // pred_check_branch
    %1560 = sbr.rel (0) target = $region25
  $region24: #{bn_add_conv.1} parent=0 // pred_region
    _
  $region25: #{bn_add_conv.1} parent=0 // pred_fallthru
    _
  // Predicated region
  $region26: #{bn_add_conv.1} parent=0 // pred_check
    _
  $region27: #{bn_add_conv.1} parent=0 // pred_check_branch
    %1562 = sbr.rel (0) target = $region29
  $region28: #{bn_add_conv.1} parent=0 // pred_region
    _
  $region29: #{bn_add_conv.1} parent=0 // pred_fallthru
    _

</llo_original>
